<compile_context>
chip_gen: v5e
topology: v5e:2x2
jax: 0.10.0
libtpu: 0.0.40
codegen_flags: <defaults>
</compile_context>

<pallas_src>
import functools

import jax
import jax.numpy as jnp
from jax.experimental import pallas as pl
from jax.experimental.pallas import tpu as pltpu


def _dilated_residual_kernel(xb_ref, h_ref, wdf_ref, bd_ref, w1_ref, b1_ref,
                             o_ref, *, dilation, kernel_size, time_tile,
                             precision):
    """One (batch, time-tile) per grid step, NCT layout, time on lanes.

    xb_ref  : (1, C, tT)       current input tile (auto-pipelined)
    h_ref   : (1, 1, C, 2*d)   [left | right] halo columns for this tile
    wdf_ref : (C, K*C)         fused dilated-conv weight (tap-major columns)
    bd_ref  : (C, 1)           dilated-conv bias
    w1_ref  : (C, C)           1x1-conv weight (C_out, C_in)
    b1_ref  : (C, 1)           1x1-conv bias
    o_ref   : (1, C, tT)       output tile
    """
    d = dilation
    tT = time_tile

    x_tile = xb_ref[0]                      # (C, tT), compute dtype
    halo = h_ref[0, 0]                      # (C, 2*d)

    # Extended window covering positions [t0-d, t0+tT+d): built purely from
    # auto-pipelined values -- no scratch buffer, no manual DMA, no zero-fill.
    x_ext = jnp.concatenate([halo[:, :d], x_tile, halo[:, d:]], axis=1)

    # Fused K-tap dilated conv: one MXU matmul with a K*C-deep contraction.
    rhs = jnp.concatenate(
        [x_ext[:, k * d:k * d + tT] for k in range(kernel_size)], axis=0)
    acc = jnp.dot(wdf_ref[...], rhs, precision=precision,
                  preferred_element_type=jnp.float32)

    act = jnp.maximum(acc + bd_ref[...], 0.0)          # bias + ReLU in f32

    # 1x1 conv + bias + residual (f32 epilogue).
    out = jnp.dot(w1_ref[...], act.astype(w1_ref.dtype), precision=precision,
                  preferred_element_type=jnp.float32) + b1_ref[...]

    # TODO(synk): nn.Dropout() is identity in eval mode; training-mode random
    # masking is intentionally omitted.
    o_ref[0] = (x_tile.astype(jnp.float32) + out).astype(o_ref.dtype)


def _pick_time_tile(T, dilation, n_batch, max_tile=4096):
    """Largest 128-multiple divisor of T (<= max_tile) that covers the halo.

    Prefers >= 2 total grid blocks when n_batch == 1 (keeps both v7x
    TensorCores busy).  Falls back to the whole sequence when no 128-multiple
    divisor works; the wrapper's VMEM guard catches oversized fallbacks.
    """
    divisors = []
    if T % 128 == 0:
        divisors = [t for t in range(128, T + 1, 128)
                    if T % t == 0 and t >= dilation]
    pool = [t for t in divisors if t <= max_tile]
    if not pool:
        return T
    if n_batch == 1:
        multi = [t for t in pool if T // t >= 2]
        if multi:
            return multi[-1]
    return pool[-1]


def dilated_residual_layer(x_nct, w_dil, b_dil, w_1x1, b_1x1, dilation,
                           kernel_size=3, time_tile=None, compute_dtype=None,
                           precision=None, max_time_tile=4096):
    """x_nct: (N, C, T) float, PyTorch Conv1d layout.  Returns (N, C, T)."""
    # TODO(synk): causal_conv=True variant (asymmetric padding + tail crop) is
    # not implemented; this matches the module's default causal_conv=False.
    N, C, T = x_nct.shape
    assert kernel_size == 3, "residual add requires 'same' conv (kernel_size=3)"
    assert w_dil.shape == (C, C, kernel_size)
    d = int(dilation)
    out_dtype = x_nct.dtype
    cdtype = out_dtype if compute_dtype is None else compute_dtype

    if time_tile is None:
        time_tile = _pick_time_tile(T, d, N, max_time_tile)
    tT = int(time_tile)
    if T % tT != 0:
        raise ValueError(f"time_tile={tT} must divide T={T}")
    if tT != T and tT % 128 != 0:
        raise ValueError("time_tile must be the full sequence or a multiple of 128")
    n_t = T // tT
    if n_t > 1 and d > tT:
        raise ValueError(f"dilation={d} exceeds time_tile={tT}; halos only reach "
                         "one neighbouring tile -- use a larger time_tile")

    # Explicit VMEM-budget guard (v7x: 64 MiB/TC physical, 32 MiB scoped limit
    # below).  Counts double-buffered in/out tiles, halos, weights and the
    # fused-RHS / f32 accumulator intermediates.
    in_b = jnp.dtype(cdtype).itemsize
    out_b = jnp.dtype(out_dtype).itemsize
    est = (2 * C * tT * (in_b + out_b)
           + 2 * C * 2 * d * in_b
           + (kernel_size + 1) * C * C * in_b
           + (kernel_size + 2) * C * tT * 4)
    if est > 24 * 1024 * 1024:
        raise ValueError(f"estimated VMEM footprint {est / 2**20:.1f} MiB exceeds "
                         "budget; pass a smaller time_tile")

    xc = x_nct.astype(cdtype)

    # Halo sidecar: for tile t, [left | right] = the d columns just before /
    # after the tile (zeros at the sequence ends, matching padding=dilation).
    # O(N*n_t*C*2d) extra HBM -- far cheaper than per-step strided halo DMAs.
    if n_t == 1:
        halos = jnp.zeros((N, 1, C, 2 * d), cdtype)
    else:
        xt = xc.reshape(N, C, n_t, tT)
        zpad = jnp.zeros((N, C, 1, d), cdtype)
        left = jnp.concatenate([zpad, xt[:, :, :-1, tT - d:]], axis=2)
        right = jnp.concatenate([xt[:, :, 1:, :d], zpad], axis=2)
        halos = jnp.transpose(jnp.concatenate([left, right], axis=3),
                              (0, 2, 1, 3))              # (N, n_t, C, 2d)

    # PyTorch weights: (C_out, C_in, K) -> fused (C_out, K*C_in), tap-major
    # column blocks matching the stacked RHS row order; (C_out, C_in, 1)->(C,C).
    wdf = jnp.transpose(w_dil, (0, 2, 1)).reshape(C, kernel_size * C).astype(cdtype)
    w1 = w_1x1.reshape(C, C).astype(cdtype)
    bd = b_dil.reshape(C, 1).astype(jnp.float32)
    b1 = b_1x1.reshape(C, 1).astype(jnp.float32)

    kernel = functools.partial(_dilated_residual_kernel, dilation=d,
                               kernel_size=kernel_size, time_tile=tT,
                               precision=precision)

    return pl.pallas_call(
        kernel,
        out_shape=jax.ShapeDtypeStruct((N, C, T), out_dtype),
        grid=(N, n_t),
        in_specs=[
            pl.BlockSpec((1, C, tT), lambda n, t: (n, 0, t)),          # x tile
            pl.BlockSpec((1, 1, C, 2 * d), lambda n, t: (n, t, 0, 0)), # halos
            pl.BlockSpec((C, kernel_size * C), lambda n, t: (0, 0)),   # W_dil
            pl.BlockSpec((C, 1), lambda n, t: (0, 0)),                 # b_dil
            pl.BlockSpec((C, C), lambda n, t: (0, 0)),                 # W_1x1
            pl.BlockSpec((C, 1), lambda n, t: (0, 0)),                 # b_1x1
        ],
        out_specs=pl.BlockSpec((1, C, tT), lambda n, t: (n, 0, t)),
        compiler_params=pltpu.CompilerParams(
            dimension_semantics=("parallel", "parallel"),
            vmem_limit_bytes=32 * 1024 * 1024),
    )(xc, halos, wdf, bd, w1, b1)


def _reference(x_nct, w_dil, b_dil, w_1x1, b_1x1, dilation):
    """Pure-JAX reference mirroring the PyTorch forward (eval mode)."""
    out = jax.lax.conv_general_dilated(
        x_nct, w_dil, window_strides=(1,),
        padding=[(dilation, dilation)], rhs_dilation=(dilation,),
        dimension_numbers=("NCH", "OIH", "NCH"))
    out = out + b_dil[None, :, None]
    out = jnp.maximum(out, 0.0)
    out = jnp.einsum("oc,nct->not", w_1x1[:, :, 0], out) + b_1x1[None, :, None]
    return x_nct + out


if __name__ == "__main__":
    # Residual add requires in_channels == out_channels (MS-TCN uses 64).
    N, C, T = 2, 64, 512
    kernel_size = 3

    key = jax.random.PRNGKey(0)
    kx, k1, k2, k3, k4 = jax.random.split(key, 5)

    x = jax.random.normal(kx, (N, C, T), dtype=jnp.float32)

    # Deterministic PyTorch-style uniform(-1/sqrt(fan_in), 1/sqrt(fan_in)) init.
    bound_d = 1.0 / (C * kernel_size) ** 0.5
    w_dil = jax.random.uniform(k1, (C, C, kernel_size), jnp.float32,
                               -bound_d, bound_d)
    b_dil = jax.random.uniform(k2, (C,), jnp.float32, -bound_d, bound_d)

    bound_1 = 1.0 / C ** 0.5
    w_1x1 = jax.random.uniform(k3, (C, C, 1), jnp.float32, -bound_1, bound_1)
    b_1x1 = jax.random.uniform(k4, (C,), jnp.float32, -bound_1, bound_1)

    # Cases: multi-tile small halo, multi-tile large halo, auto single tile,
    # N=1 auto-split (>=2 grid blocks), and the bf16 compute path.
    cases = [
        (x,      2,  128,  None,          1e-3),
        (x,      64, 128,  None,          1e-3),
        (x,      4,  None, None,          1e-3),
        (x[:1],  1,  None, None,          1e-3),
        (x,      2,  None, jnp.bfloat16,  6e-2),
    ]
    for xi, dilation, tt, cdt, tol in cases:
        out = dilated_residual_layer(xi, w_dil, b_dil, w_1x1, b_1x1, dilation,
                                     kernel_size, time_tile=tt,
                                     compute_dtype=cdt)
        out = jax.block_until_ready(out)
        ref = _reference(xi, w_dil, b_dil, w_1x1, b_1x1, dilation)
        assert out.shape == xi.shape
        assert jnp.allclose(out, ref, atol=tol, rtol=tol), (
            f"mismatch vs reference (dilation={dilation}, tile={tt}, dtype={cdt})")

    print("KERNEL_OK")
</pallas_src>

<mosaic_0001>
module attributes {stable_mosaic.version = 11 : i64} {
  func.func @_dilated_residual_kernel(%arg0: i32, %arg1: i32, %arg2: memref<1x64x128xf32, #tpu.memory_space<vmem>>, %arg3: memref<1x1x64x4xf32, #tpu.memory_space<vmem>>, %arg4: memref<64x192xf32, #tpu.memory_space<vmem>>, %arg5: memref<64x1xf32, #tpu.memory_space<vmem>>, %arg6: memref<64x64xf32, #tpu.memory_space<vmem>>, %arg7: memref<64x1xf32, #tpu.memory_space<vmem>>, %arg8: memref<1x64x128xf32, #tpu.memory_space<vmem>>) attributes {dimension_semantics = [#tpu.dimension_semantics<parallel>, #tpu.dimension_semantics<parallel>], iteration_bounds = array<i64: 2, 4>, scalar_prefetch = 0 : i64, scratch_operands = 0 : i64, tpu.core_type = #tpu.core_type<tc>, window_params = [{transform_indices = @transform_0, window_bounds = array<i64: 1, 64, 128>}, {transform_indices = @transform_1, window_bounds = array<i64: 1, 1, 64, 4>}, {pipeline_mode = #tpu.pipeline_mode<synchronous>, transform_indices = @transform_2, window_bounds = array<i64: 64, 192>}, {pipeline_mode = #tpu.pipeline_mode<synchronous>, transform_indices = @transform_3, window_bounds = array<i64: 64, 1>}, {pipeline_mode = #tpu.pipeline_mode<synchronous>, transform_indices = @transform_4, window_bounds = array<i64: 64, 64>}, {pipeline_mode = #tpu.pipeline_mode<synchronous>, transform_indices = @transform_5, window_bounds = array<i64: 64, 1>}, {transform_indices = @transform_6, window_bounds = array<i64: 1, 64, 128>}]} {
    %c0 = arith.constant 0 : index
    %c0_0 = arith.constant 0 : index
    %c0_1 = arith.constant 0 : index
    %0 = vector.load %arg2[%c0, %c0_0, %c0_1] : memref<1x64x128xf32, #tpu.memory_space<vmem>>, vector<1x64x128xf32>
    %1 = vector.shape_cast %0 : vector<1x64x128xf32> to vector<64x128xf32>
    %c0_2 = arith.constant 0 : index
    %c0_3 = arith.constant 0 : index
    %c0_4 = arith.constant 0 : index
    %c0_5 = arith.constant 0 : index
    %2 = vector.load %arg3[%c0_2, %c0_3, %c0_4, %c0_5] : memref<1x1x64x4xf32, #tpu.memory_space<vmem>>, vector<1x1x64x4xf32>
    %3 = vector.shape_cast %2 : vector<1x1x64x4xf32> to vector<64x4xf32>
    %4 = vector.extract_strided_slice %3 {offsets = [0, 0], sizes = [64, 2], strides = [1, 1]} : vector<64x4xf32> to vector<64x2xf32>
    %5 = vector.extract_strided_slice %3 {offsets = [0, 2], sizes = [64, 2], strides = [1, 1]} : vector<64x4xf32> to vector<64x2xf32>
    %6 = tpu.concatenate %4, %1, %5 in 1 : vector<64x2xf32>, vector<64x128xf32>, vector<64x2xf32> -> vector<64x132xf32>
    %7 = vector.extract_strided_slice %6 {offsets = [0, 0], sizes = [64, 128], strides = [1, 1]} : vector<64x132xf32> to vector<64x128xf32>
    %8 = vector.extract_strided_slice %6 {offsets = [0, 2], sizes = [64, 128], strides = [1, 1]} : vector<64x132xf32> to vector<64x128xf32>
    %9 = vector.extract_strided_slice %6 {offsets = [0, 4], sizes = [64, 128], strides = [1, 1]} : vector<64x132xf32> to vector<64x128xf32>
    %10 = tpu.concatenate %7, %8, %9 in 0 : vector<64x128xf32>, vector<64x128xf32>, vector<64x128xf32> -> vector<192x128xf32>
    %c0_6 = arith.constant 0 : index
    %c0_7 = arith.constant 0 : index
    %11 = vector.load %arg4[%c0_6, %c0_7] : memref<64x192xf32, #tpu.memory_space<vmem>>, vector<64x192xf32>
    %cst = arith.constant dense<0.000000e+00> : vector<64x128xf32>
    %12 = tpu.matmul %11, %10, %cst {dimension_numbers = #tpu.dot_dimension_numbers<[1], [0], [0], [1], [0, 0, 1, 1], [], []>} : vector<64x192xf32>, vector<192x128xf32>, vector<64x128xf32> -> vector<64x128xf32>
    %c0_8 = arith.constant 0 : index
    %c0_9 = arith.constant 0 : index
    %13 = vector.load %arg5[%c0_8, %c0_9] : memref<64x1xf32, #tpu.memory_space<vmem>>, vector<64x1xf32>
    %14 = vector.broadcast %13 : vector<64x1xf32> to vector<64x128xf32>
    %15 = arith.addf %12, %14 : vector<64x128xf32>
    %cst_10 = arith.constant 0.000000e+00 : f32
    %16 = vector.broadcast %cst_10 : f32 to vector<64x128xf32>
    %17 = arith.maximumf %15, %16 : vector<64x128xf32>
    %c0_11 = arith.constant 0 : index
    %c0_12 = arith.constant 0 : index
    %18 = vector.load %arg6[%c0_11, %c0_12] : memref<64x64xf32, #tpu.memory_space<vmem>>, vector<64x64xf32>
    %cst_13 = arith.constant dense<0.000000e+00> : vector<64x128xf32>
    %19 = tpu.matmul %18, %17, %cst_13 {dimension_numbers = #tpu.dot_dimension_numbers<[1], [0], [0], [1], [0, 0, 1, 1], [], []>} : vector<64x64xf32>, vector<64x128xf32>, vector<64x128xf32> -> vector<64x128xf32>
    %c0_14 = arith.constant 0 : index
    %c0_15 = arith.constant 0 : index
    %20 = vector.load %arg7[%c0_14, %c0_15] : memref<64x1xf32, #tpu.memory_space<vmem>>, vector<64x1xf32>
    %21 = vector.broadcast %20 : vector<64x1xf32> to vector<64x128xf32>
    %22 = arith.addf %19, %21 : vector<64x128xf32>
    %23 = arith.addf %1, %22 : vector<64x128xf32>
    %c0_16 = arith.constant 0 : index
    %c0_17 = arith.constant 0 : index
    %c0_18 = arith.constant 0 : index
    %24 = vector.load %arg8[%c0_16, %c0_17, %c0_18] : memref<1x64x128xf32, #tpu.memory_space<vmem>>, vector<1x64x128xf32>
    %25 = vector.shape_cast %24 : vector<1x64x128xf32> to vector<64x128xf32>
    %26 = vector.shape_cast %23 : vector<64x128xf32> to vector<1x64x128xf32>
    tpu.vector_store %arg8[%c0_16, %c0_17, %c0_18], %26 {strides = array<i32>} : memref<1x64x128xf32, #tpu.memory_space<vmem>>, vector<1x64x128xf32>,
    return
  }
  func.func @transform_0(%arg0: i32, %arg1: i32) -> (i32, i32, i32) {
    %c0_i32 = arith.constant 0 : i32
    %c0_i32_0 = arith.constant 0 : i32
    return %arg0, %c0_i32, %arg1 : i32, i32, i32
  }
  func.func @transform_1(%arg0: i32, %arg1: i32) -> (i32, i32, i32, i32) {
    %c0_i32 = arith.constant 0 : i32
    %c0_i32_0 = arith.constant 0 : i32
    %c0_i32_1 = arith.constant 0 : i32
    return %arg0, %arg1, %c0_i32, %c0_i32_0 : i32, i32, i32, i32
  }
  func.func @transform_2(%arg0: i32, %arg1: i32) -> (i32, i32) {
    %c0_i32 = arith.constant 0 : i32
    %c0_i32_0 = arith.constant 0 : i32
    %c0_i32_1 = arith.constant 0 : i32
    return %c0_i32, %c0_i32_0 : i32, i32
  }
  func.func @transform_3(%arg0: i32, %arg1: i32) -> (i32, i32) {
    %c0_i32 = arith.constant 0 : i32
    %c0_i32_0 = arith.constant 0 : i32
    %c0_i32_1 = arith.constant 0 : i32
    return %c0_i32, %c0_i32_0 : i32, i32
  }
  func.func @transform_4(%arg0: i32, %arg1: i32) -> (i32, i32) {
    %c0_i32 = arith.constant 0 : i32
    %c0_i32_0 = arith.constant 0 : i32
    %c0_i32_1 = arith.constant 0 : i32
    return %c0_i32, %c0_i32_0 : i32, i32
  }
  func.func @transform_5(%arg0: i32, %arg1: i32) -> (i32, i32) {
    %c0_i32 = arith.constant 0 : i32
    %c0_i32_0 = arith.constant 0 : i32
    %c0_i32_1 = arith.constant 0 : i32
    return %c0_i32, %c0_i32_0 : i32, i32
  }
  func.func @transform_6(%arg0: i32, %arg1: i32) -> (i32, i32, i32) {
    %c0_i32 = arith.constant 0 : i32
    %c0_i32_0 = arith.constant 0 : i32
    return %arg0, %c0_i32, %arg1 : i32, i32, i32
  }
}

</mosaic_0001>

<llo_original>
// kernel: tpu_custom_call.1
$region0: #{tpu_custom_call.1}
  #allocation0 [shape = 'u32[]', space=smem, size = 0x4, offset = 0x4, fixed_abs, tag = 'smem constant byte address 0x4 - core index']
  #allocation1 [shape = 'u32[72,128]{1,0:T(1,128)}', space=vmem, size = 0x9000, scoped, tag = 'internal scratch']
  %s0 = inlined_call_operand.vmem [shape: f32[2,64,512], index: 0, kind: input, shape index: {}]
  %s1 = inlined_call_operand.vmem [shape: f32[2,4,64,4], index: 1, kind: input, shape index: {}]
  %s2 = inlined_call_operand.hbm [shape: f32[64,192], index: 2, kind: input, shape index: {}]
  %s3 = inlined_call_operand.vmem [shape: f32[64,1], index: 3, kind: input, shape index: {}]
  %s4 = inlined_call_operand.vmem [shape: f32[64,64], index: 4, kind: input, shape index: {}]
  %s5 = inlined_call_operand.vmem [shape: f32[64,1], index: 5, kind: input, shape index: {}]
  %s6 = inlined_call_operand.hbm [shape: f32[2,64,512], index: 6, kind: output, shape index: {}]
  %s7 = sld [smem:[#allocation0]]
  $region99: #{tpu_custom_call.1} parent=0
    _
  %s9 = ssub.s32 1, %s7
  %s10 = scalar_select 0, %s9, %s7
  $region1: #{tpu_custom_call.1} parent=0
    #allocation2 [shape = 'u8[65536]{0}', space=vmem, size = 0x10000, scoped, tag = 'input window, operand 0']
    #allocation3 [shape = 'u8[65536]{0}', space=vmem, size = 0x10000, scoped, tag = 'input window, operand 2, single buffered']
    #allocation4 [shape = 's32[2]{0}', space=sflag, size = 0x8, scoped, tag = 'scoped memory for tpu_custom_call.1']
    #allocation5 [shape = 's32[2]{0}', space=sflag, size = 0x8, scoped, tag = 'scoped memory for tpu_custom_call.1']
    #allocation6 [shape = 'u8[65536]{0}', space=vmem, size = 0x10000, scoped, tag = 'output window, operand 0']
    %11 = vsyncpa [#allocation4], 0
    %12 = vsyncpa [#allocation5], 0
    %s13 = scalar_lea.sflag [#allocation5], 1
    %14 = vsyncpa %s13, 0
    loop: start=0, step=1, limit=10
    $region2: #{tpu_custom_call.1} parent=1 // loop_pre_header
      _
    $region3: #{tpu_custom_call.1} parent=1 // loop_header
      %s16 = sphi 0, %s20
      %p17 = scmp.ge.s32.totalorder %s16, 10
      %s23 = sphi 0, %s35
      %s24 = sphi 0, %s31
      %s25 = sphi 0, %s23
      %s26 = sphi 0, %s24
      %s27 = sphi 0, %s25
      %s28 = sphi 0, %s26
      %s40 = sphi 0, %s42
      %s43 = sphi 0, %s40
      %s44 = sphi 0, %s43
      %s60 = sphi 0, %s44
      %s68 = sphi 0, %s70
      %s71 = sphi 0, %s68
      %s72 = sphi 0, %s71
      %s88 = sphi 0, %s72
      %s92 = sphi 0, %s92
      %s94 = sphi 0, %s92
      %s95 = sphi 0, %s94
      %s109 = sphi 0, %s95
      %s113 = sphi 0, %s113
      %s115 = sphi 0, %s113
      %s116 = sphi 0, %s115
      %s130 = sphi 0, %s116
      %s134 = sphi 0, %s134
      %s136 = sphi 0, %s134
      %s137 = sphi 0, %s136
      %s151 = sphi 0, %s137
      %s155 = sphi 0, %s155
      %s157 = sphi 0, %s155
      %s158 = sphi 0, %s157
      %s172 = sphi 0, %s158
      %s180 = sphi 0, %s182
      %s183 = sphi 0, %s180
      %s184 = sphi 0, %s183
      %s200 = sphi 0, %s184
    $region4: #{tpu_custom_call.1} parent=1 // loop_header_branch
      %19 = sbr.rel (%p17) target = $region8
    $region5: #{tpu_custom_call.1} parent=1 // loop_body
      %s21 = ssub.s32 %s16, 1
      %s22 = ssub.s32 %s16, 2
      %s29 = sadd.s32 1, %s24
      %p30 = scmp.ge.s32.totalorder %s29, 4
      %s31 = scalar_select %p30, 0, %s29
      %s32 = sadd.s32 1, %s23
      %s33 = scalar_select %p30, %s32, %s23
      %p34 = scmp.ge.s32.totalorder %s33, 2
      %s35 = scalar_select %p34, 0, %s33
      %s36 = ssub.s32 %s23, %s35
      %s37 = ssub.s32 %s24, %s31
      %s38 = sor.u32 %s36, %s37
      %p39 = scmp.eq.s32.totalorder %s38, 0
      %s41 = sadd.s32 %s40, 1
      %s42 = scalar_select %p39, %s40, %s41
      %p45 = pneg %p39
      %p46 = scmp.eq.s32.totalorder %s16, 7
      %p47 = por %p45, %p46
      %p48 = scmp.ne.s32.totalorder %s40, %s43
      %p49 = scmp.eq.s32.totalorder %s16, 0
      %p50 = por %p48, %p49
      %p51 = scmp.ne.s32.totalorder %s40, %s43
      %p52 = scmp.eq.s32.totalorder %s21, 7
      %p53 = por %p51, %p52
      %p54 = scmp.ne.s32.totalorder %s43, %s44
      %p55 = scmp.eq.s32.totalorder %s21, 0
      %p56 = por %p54, %p55
      %p57 = scmp.ne.s32.totalorder %s43, %s44
      %p58 = scmp.eq.s32.totalorder %s22, 7
      %p59 = por %p57, %p58
      %p61 = scmp.ne.s32.totalorder %s44, %s60
      %p62 = scmp.eq.s32.totalorder %s22, 0
      %p63 = por %p61, %p62
      %s64 = ssub.s32 %s23, %s35
      %s65 = ssub.s32 %s24, %s31
      %s66 = sor.u32 %s64, %s65
      %p67 = scmp.eq.s32.totalorder %s66, 0
      %s69 = sadd.s32 %s68, 1
      %s70 = scalar_select %p67, %s68, %s69
      %p73 = pneg %p67
      %p74 = scmp.eq.s32.totalorder %s16, 7
      %p75 = por %p73, %p74
      %p76 = scmp.ne.s32.totalorder %s68, %s71
      %p77 = scmp.eq.s32.totalorder %s16, 0
      %p78 = por %p76, %p77
      %p79 = scmp.ne.s32.totalorder %s68, %s71
      %p80 = scmp.eq.s32.totalorder %s21, 7
      %p81 = por %p79, %p80
      %p82 = scmp.ne.s32.totalorder %s71, %s72
      %p83 = scmp.eq.s32.totalorder %s21, 0
      %p84 = por %p82, %p83
      %p85 = scmp.ne.s32.totalorder %s71, %s72
      %p86 = scmp.eq.s32.totalorder %s22, 7
      %p87 = por %p85, %p86
      %p89 = scmp.ne.s32.totalorder %s72, %s88
      %p90 = scmp.eq.s32.totalorder %s22, 0
      %p91 = por %p89, %p90
      %s93 = sadd.s32 %s92, 1
      %p96 = scmp.eq.s32.totalorder %s16, 7
      %p97 = scmp.ne.s32.totalorder %s92, %s94
      %p98 = scmp.eq.s32.totalorder %s16, 0
      %p99 = por %p97, %p98
      %p100 = scmp.ne.s32.totalorder %s92, %s94
      %p101 = scmp.eq.s32.totalorder %s21, 7
      %p102 = por %p100, %p101
      %p103 = scmp.ne.s32.totalorder %s94, %s95
      %p104 = scmp.eq.s32.totalorder %s21, 0
      %p105 = por %p103, %p104
      %p106 = scmp.ne.s32.totalorder %s94, %s95
      %p107 = scmp.eq.s32.totalorder %s22, 7
      %p108 = por %p106, %p107
      %p110 = scmp.ne.s32.totalorder %s95, %s109
      %p111 = scmp.eq.s32.totalorder %s22, 0
      %p112 = por %p110, %p111
      %s114 = sadd.s32 %s113, 1
      %p117 = scmp.eq.s32.totalorder %s16, 7
      %p118 = scmp.ne.s32.totalorder %s113, %s115
      %p119 = scmp.eq.s32.totalorder %s16, 0
      %p120 = por %p118, %p119
      %p121 = scmp.ne.s32.totalorder %s113, %s115
      %p122 = scmp.eq.s32.totalorder %s21, 7
      %p123 = por %p121, %p122
      %p124 = scmp.ne.s32.totalorder %s115, %s116
      %p125 = scmp.eq.s32.totalorder %s21, 0
      %p126 = por %p124, %p125
      %p127 = scmp.ne.s32.totalorder %s115, %s116
      %p128 = scmp.eq.s32.totalorder %s22, 7
      %p129 = por %p127, %p128
      %p131 = scmp.ne.s32.totalorder %s116, %s130
      %p132 = scmp.eq.s32.totalorder %s22, 0
      %p133 = por %p131, %p132
      %s135 = sadd.s32 %s134, 1
      %p138 = scmp.eq.s32.totalorder %s16, 7
      %p139 = scmp.ne.s32.totalorder %s134, %s136
      %p140 = scmp.eq.s32.totalorder %s16, 0
      %p141 = por %p139, %p140
      %p142 = scmp.ne.s32.totalorder %s134, %s136
      %p143 = scmp.eq.s32.totalorder %s21, 7
      %p144 = por %p142, %p143
      %p145 = scmp.ne.s32.totalorder %s136, %s137
      %p146 = scmp.eq.s32.totalorder %s21, 0
      %p147 = por %p145, %p146
      %p148 = scmp.ne.s32.totalorder %s136, %s137
      %p149 = scmp.eq.s32.totalorder %s22, 7
      %p150 = por %p148, %p149
      %p152 = scmp.ne.s32.totalorder %s137, %s151
      %p153 = scmp.eq.s32.totalorder %s22, 0
      %p154 = por %p152, %p153
      %s156 = sadd.s32 %s155, 1
      %p159 = scmp.eq.s32.totalorder %s16, 7
      %p160 = scmp.ne.s32.totalorder %s155, %s157
      %p161 = scmp.eq.s32.totalorder %s16, 0
      %p162 = por %p160, %p161
      %p163 = scmp.ne.s32.totalorder %s155, %s157
      %p164 = scmp.eq.s32.totalorder %s21, 7
      %p165 = por %p163, %p164
      %p166 = scmp.ne.s32.totalorder %s157, %s158
      %p167 = scmp.eq.s32.totalorder %s21, 0
      %p168 = por %p166, %p167
      %p169 = scmp.ne.s32.totalorder %s157, %s158
      %p170 = scmp.eq.s32.totalorder %s22, 7
      %p171 = por %p169, %p170
      %p173 = scmp.ne.s32.totalorder %s158, %s172
      %p174 = scmp.eq.s32.totalorder %s22, 0
      %p175 = por %p173, %p174
      %s176 = ssub.s32 %s23, %s35
      %s177 = ssub.s32 %s24, %s31
      %s178 = sor.u32 %s176, %s177
      %p179 = scmp.eq.s32.totalorder %s178, 0
      %s181 = sadd.s32 %s180, 1
      %s182 = scalar_select %p179, %s180, %s181
      %p185 = pneg %p179
      %p186 = scmp.eq.s32.totalorder %s16, 7
      %p187 = por %p185, %p186
      %p188 = scmp.ne.s32.totalorder %s180, %s183
      %p189 = scmp.eq.s32.totalorder %s16, 0
      %p190 = por %p188, %p189
      %p191 = scmp.ne.s32.totalorder %s180, %s183
      %p192 = scmp.eq.s32.totalorder %s21, 7
      %p193 = por %p191, %p192
      %p194 = scmp.ne.s32.totalorder %s183, %s184
      %p195 = scmp.eq.s32.totalorder %s21, 0
      %p196 = por %p194, %p195
      %p197 = scmp.ne.s32.totalorder %s183, %s184
      %p198 = scmp.eq.s32.totalorder %s22, 7
      %p199 = por %p197, %p198
      %p201 = scmp.ne.s32.totalorder %s184, %s200
      %p202 = scmp.eq.s32.totalorder %s22, 0
      %p203 = por %p201, %p202
      %p204 = scmp.le.s32.totalorder 1, %s16
      %p205 = scmp.lt.s32.totalorder %s16, 9
      %p206 = pnand %p204, %p205
      %p207 = pneg %p206
      // Predicated region
      $region9: #{tpu_custom_call.1} parent=5 // pred_check
        _
      $region10: #{tpu_custom_call.1} parent=5 // pred_check_branch
        %209 = sbr.rel (%p206) target = $region12
      $region11: #{tpu_custom_call.1} parent=5 // pred_region
        %s210 = ssub.s32 %s16, 1
        // Predicated region
        $region13: #{tpu_custom_call.1} parent=11 // pred_check
          %p211 = pneg %p105
        $region14: #{tpu_custom_call.1} parent=11 // pred_check_branch
          %213 = sbr.rel (%p211) target = $region16
        $region15: #{tpu_custom_call.1} parent=11 // pred_region
          %215 = vsyncadd [#allocation4], 0
          %s216 = sshll.u32 %s2, 4
          %s217 = int_to_ptr.hbm [resolvable:$true] %s216
          %s218 = sshll.u32 [#allocation3], 4
          %s219 = int_to_ptr.vmem [resolvable:$true] %s218
          %224 = dma.hbm_to_vmem [thread:$0]  %s217, 2048, %s219, [#allocation4], 256, 256, 16
        $region16: #{tpu_custom_call.1} parent=11 // pred_fallthru
          _
        // Predicated region
        $region17: #{tpu_custom_call.1} parent=11 // pred_check
          %p225 = pneg %p126
        $region18: #{tpu_custom_call.1} parent=11 // pred_check_branch
          %227 = sbr.rel (%p225) target = $region20
        $region19: #{tpu_custom_call.1} parent=11 // pred_region
          _
        $region20: #{tpu_custom_call.1} parent=11 // pred_fallthru
          _
        // Predicated region
        $region21: #{tpu_custom_call.1} parent=11 // pred_check
          %p228 = pneg %p147
        $region22: #{tpu_custom_call.1} parent=11 // pred_check_branch
          %230 = sbr.rel (%p228) target = $region24
        $region23: #{tpu_custom_call.1} parent=11 // pred_region
          _
        $region24: #{tpu_custom_call.1} parent=11 // pred_fallthru
          _
        // Predicated region
        $region25: #{tpu_custom_call.1} parent=11 // pred_check
          %p231 = pneg %p168
        $region26: #{tpu_custom_call.1} parent=11 // pred_check_branch
          %233 = sbr.rel (%p231) target = $region28
        $region27: #{tpu_custom_call.1} parent=11 // pred_region
          _
        $region28: #{tpu_custom_call.1} parent=11 // pred_fallthru
          _
      $region12: #{tpu_custom_call.1} parent=5 // pred_fallthru
        _
      %p234 = scmp.lt.s32.totalorder %s16, 8
      // Predicated region
      $region29: #{tpu_custom_call.1} parent=5 // pred_check
        %p235 = pneg %p234
      $region30: #{tpu_custom_call.1} parent=5 // pred_check_branch
        %237 = sbr.rel (%p235) target = $region32
      $region31: #{tpu_custom_call.1} parent=5 // pred_region
        // Predicated region
        $region33: #{tpu_custom_call.1} parent=31 // pred_check
          %p238 = pneg %p50
        $region34: #{tpu_custom_call.1} parent=31 // pred_check_branch
          %240 = sbr.rel (%p238) target = $region36
        $region35: #{tpu_custom_call.1} parent=31 // pred_region
          %s241 = sand.u32 %s40, 1
          %s242 = sand.u32 %s40, 1
          %s243 = smul.addr %s242, 64
          %s244 = scalar_lea.vmem [#allocation2], %s243
          %s245 = smul.addr %s23, 32
          %s246 = sadd.s32 %s24, %s245
          %s247 = smul.addr %s246, 8
          %s248 = scalar_lea.vmem %s0, %s247
          // Predicated region
          $region37: #{tpu_custom_call.1} parent=35 // pred_check
            _
          $region38: #{tpu_custom_call.1} parent=35 // pred_check_branch
            %250 = sbr.rel (0) target = $region40
          $region39: #{tpu_custom_call.1} parent=35 // pred_region
            // Predicated region
            $region41: #{tpu_custom_call.1} parent=39 // pred_check
              _
            $region42: #{tpu_custom_call.1} parent=39 // pred_check_branch
              %252 = sbr.rel (0) target = $region44
            $region43: #{tpu_custom_call.1} parent=39 // pred_region
              // Predicated region
              $region56: #{tpu_custom_call.1} parent=43 // pred_check
                _
              $region57: #{tpu_custom_call.1} parent=43 // pred_check_branch
                %282 = sbr.rel (0) target = $region59
              $region58: #{tpu_custom_call.1} parent=43 // pred_region
                loop: start=0, step=1, limit=1
                $region60: #{tpu_custom_call.1} parent=58 // loop_pre_header
                  _
                $region61: #{tpu_custom_call.1} parent=58 // loop_header
                  %s284 = sphi 0, %s288
                  %p285 = scmp.ge.s32.totalorder %s284, 1
                  %s289 = sphi %s248, %s248
                  %s290 = sphi %s244, %s244
                $region62: #{tpu_custom_call.1} parent=58 // loop_header_branch
                  %287 = sbr.rel (%p285) target = $region66
                $region63: #{tpu_custom_call.1} parent=58 // loop_body
                  %v291 = vld [vmem:[%s289] sm:$0xff]
                  %292 = vst [vmem:[%s290] sm:$0xff] %v291
                  %v293 = vld [vmem:[%s289 + $0x20] sm:$0xff]
                  %294 = vst [vmem:[%s290 + $0x8] sm:$0xff] %v293
                  %v295 = vld [vmem:[%s289 + $0x40] sm:$0xff]
                  %296 = vst [vmem:[%s290 + $0x10] sm:$0xff] %v295
                  %v297 = vld [vmem:[%s289 + $0x60] sm:$0xff]
                  %298 = vst [vmem:[%s290 + $0x18] sm:$0xff] %v297
                  %v299 = vld [vmem:[%s289 + $0x80] sm:$0xff]
                  %300 = vst [vmem:[%s290 + $0x20] sm:$0xff] %v299
                  %v301 = vld [vmem:[%s289 + $0xa0] sm:$0xff]
                  %302 = vst [vmem:[%s290 + $0x28] sm:$0xff] %v301
                  %v303 = vld [vmem:[%s289 + $0xc0] sm:$0xff]
                  %304 = vst [vmem:[%s290 + $0x30] sm:$0xff] %v303
                  %v305 = vld [vmem:[%s289 + $0xe0] sm:$0xff]
                  %306 = vst [vmem:[%s290 + $0x38] sm:$0xff] %v305
                $region64: #{tpu_custom_call.1} parent=58 // loop_footer
                  %s288 = sadd.s32 1, %s284
                $region65: #{tpu_custom_call.1} parent=58 // loop_footer_branch
                  %283 = sbr.rel target = $region61
                $region66: #{tpu_custom_call.1} parent=58 // loop_exit
                  _
              $region59: #{tpu_custom_call.1} parent=43 // pred_fallthru
                _
              // Predicated region
              $region67: #{tpu_custom_call.1} parent=43 // pred_check
                _
              $region68: #{tpu_custom_call.1} parent=43 // pred_check_branch
                %308 = sbr.rel target = $region70
              $region69: #{tpu_custom_call.1} parent=43 // pred_region
                _
              $region70: #{tpu_custom_call.1} parent=43 // pred_fallthru
                _
            $region44: #{tpu_custom_call.1} parent=39 // pred_fallthru
              _
            // Predicated region
            $region45: #{tpu_custom_call.1} parent=39 // pred_check
              _
            $region46: #{tpu_custom_call.1} parent=39 // pred_check_branch
              %254 = sbr.rel target = $region48
            $region47: #{tpu_custom_call.1} parent=39 // pred_region
              %s256 = ssub.s32 256, 1
              loop: start=0, step=1, limit=1
              $region49: #{tpu_custom_call.1} parent=47 // loop_pre_header
                _
              $region50: #{tpu_custom_call.1} parent=47 // loop_header
                %s258 = sphi 0, %s262
                %p259 = scmp.ge.s32.totalorder %s258, 1
                %s263 = sphi %s248, %s248
                %s264 = sphi %s244, %s244
              $region51: #{tpu_custom_call.1} parent=47 // loop_header_branch
                %261 = sbr.rel (%p259) target = $region55
              $region52: #{tpu_custom_call.1} parent=47 // loop_body
                %v265 = vld [vmem:[%s263] sm:%s256]
                %266 = vst [vmem:[%s264] sm:%s256] %v265
                %v267 = vld [vmem:[%s263 + $0x20] sm:%s256]
                %268 = vst [vmem:[%s264 + $0x8] sm:%s256] %v267
                %v269 = vld [vmem:[%s263 + $0x40] sm:%s256]
                %270 = vst [vmem:[%s264 + $0x10] sm:%s256] %v269
                %v271 = vld [vmem:[%s263 + $0x60] sm:%s256]
                %272 = vst [vmem:[%s264 + $0x18] sm:%s256] %v271
                %v273 = vld [vmem:[%s263 + $0x80] sm:%s256]
                %274 = vst [vmem:[%s264 + $0x20] sm:%s256] %v273
                %v275 = vld [vmem:[%s263 + $0xa0] sm:%s256]
                %276 = vst [vmem:[%s264 + $0x28] sm:%s256] %v275
                %v277 = vld [vmem:[%s263 + $0xc0] sm:%s256]
                %278 = vst [vmem:[%s264 + $0x30] sm:%s256] %v277
                %v279 = vld [vmem:[%s263 + $0xe0] sm:%s256]
                %280 = vst [vmem:[%s264 + $0x38] sm:%s256] %v279
              $region53: #{tpu_custom_call.1} parent=47 // loop_footer
                %s262 = sadd.s32 1, %s258
              $region54: #{tpu_custom_call.1} parent=47 // loop_footer_branch
                %257 = sbr.rel target = $region50
              $region55: #{tpu_custom_call.1} parent=47 // loop_exit
                _
            $region48: #{tpu_custom_call.1} parent=39 // pred_fallthru
              _
          $region40: #{tpu_custom_call.1} parent=35 // pred_fallthru
            _
          %309 = vnop
        $region36: #{tpu_custom_call.1} parent=31 // pred_fallthru
          _
        // Predicated region
        $region71: #{tpu_custom_call.1} parent=31 // pred_check
          %p310 = pneg %p78
        $region72: #{tpu_custom_call.1} parent=31 // pred_check_branch
          %312 = sbr.rel (%p310) target = $region74
        $region73: #{tpu_custom_call.1} parent=31 // pred_region
          %p313 = scmp.lt.s32.totalorder %s23, 1
          %s314 = scalar_select %p313, %s23, 1
          %p315 = scmp.lt.s32.totalorder %s24, 3
          %s316 = scalar_select %p315, %s24, 3
          %s317 = smul.addr %s316, 8
          %s318 = smul.addr %s314, 32
          %s319 = sadd.s32 %s317, %s318
          %s320 = smul.addr %s319, 8
          %s321 = scalar_lea.vmem %s1, %s320
        $region74: #{tpu_custom_call.1} parent=31 // pred_fallthru
          _
      $region32: #{tpu_custom_call.1} parent=5 // pred_fallthru
        _
      %p322 = scmp.le.s32.totalorder 1, %s16
      %p323 = scmp.lt.s32.totalorder %s16, 9
      %p324 = pnand %p322, %p323
      %p325 = pneg %p324
      // Predicated region
      $region75: #{tpu_custom_call.1} parent=5 // pred_check
        _
      $region76: #{tpu_custom_call.1} parent=5 // pred_check_branch
        %327 = sbr.rel (%p324) target = $region78
      $region77: #{tpu_custom_call.1} parent=5 // pred_region
        %s328 = ssub.s32 %s16, 1
        %s329 = sand.u32 %s43, 1
        %s330 = sand.u32 %s43, 1
        %s331 = smul.addr %s330, 64
        %s332 = scalar_lea.vmem [#allocation2], %s331
        // Predicated region
        $region79: #{tpu_custom_call.1} parent=77 // pred_check
          %p333 = pneg %p56
        $region80: #{tpu_custom_call.1} parent=77 // pred_check_branch
          %335 = sbr.rel (%p333) target = $region82
        $region81: #{tpu_custom_call.1} parent=77 // pred_region
          _
        $region82: #{tpu_custom_call.1} parent=77 // pred_fallthru
          _
        // Predicated region
        $region83: #{tpu_custom_call.1} parent=77 // pred_check
          %p336 = pneg %p105
        $region84: #{tpu_custom_call.1} parent=77 // pred_check_branch
          %338 = sbr.rel (%p336) target = $region86
        $region85: #{tpu_custom_call.1} parent=77 // pred_region
          %340 = dma.done [#allocation4], 2048
        $region86: #{tpu_custom_call.1} parent=77 // pred_fallthru
          _
        %s341 = sand.u32 %s43, 1
        %s342 = sand.u32 %s43, 1
        %s343 = smul.addr %s342, 64
        %s344 = scalar_lea.vmem [#allocation2], %s343
        %p345 = pneg %p56
        %p346 = pneg %p53
        %p347 = scmp.lt.s32.totalorder %s25, 1
        %s348 = scalar_select %p347, %s25, 1
        %p349 = scmp.lt.s32.totalorder %s26, 3
        %s350 = scalar_select %p349, %s26, 3
        %s351 = smul.addr %s350, 8
        %s352 = smul.addr %s348, 32
        %s353 = sadd.s32 %s351, %s352
        %s354 = smul.addr %s353, 8
        %s355 = scalar_lea.vmem %s1, %s354
        %p356 = pneg %p84
        %p357 = pneg %p81
        %p358 = pneg %p105
        %p359 = pneg %p102
        %p360 = pneg %p126
        %p361 = pneg %p123
        %p362 = pneg %p147
        %p363 = pneg %p144
        %p364 = pneg %p168
        %p365 = pneg %p165
        %p366 = pneg %p196
        %p367 = pneg %p193
        %s368 = sand.u32 %s183, 1
        %s369 = scalar_lea.sflag [#allocation5], %s368
        %s370 = sand.u32 %s183, 1
        %s371 = smul.addr %s370, 64
        %s372 = scalar_lea.vmem [#allocation6], %s371
        %p373 = scmp.lt.s32.totalorder %s25, 1
        %s374 = scalar_select %p373, %s25, 1
        %p375 = scmp.lt.s32.totalorder %s26, 3
        %s376 = scalar_select %p375, %s26, 3
        %s377 = smul.addr %s376, 8
        %s378 = smul.addr %s374, 32
        %s379 = sadd.s32 %s377, %s378
        %s380 = smul.addr %s379, 8
        %s381 = scalar_lea.vmem %s1, %s380
        %v382 = vld [vmem:[%s332] sm:$0xff]
        %v383 = vld [vmem:[%s332 + $0x8] sm:$0xff]
        %v384 = vld [vmem:[%s332 + $0x10] sm:$0xff]
        %v385 = vld [vmem:[%s332 + $0x18] sm:$0xff]
        %v386 = vld [vmem:[%s332 + $0x20] sm:$0xff]
        %v387 = vld [vmem:[%s332 + $0x28] sm:$0xff]
        %v388 = vld [vmem:[%s332 + $0x30] sm:$0xff]
        %v389 = vld [vmem:[%s332 + $0x38] sm:$0xff]
        %v390 = vld [vmem:[%s381] sm:$0xff]
        %v391 = vld [vmem:[%s381 + $0x8] sm:$0xff]
        %v392 = vld [vmem:[%s381 + $0x10] sm:$0xff]
        %v393 = vld [vmem:[%s381 + $0x18] sm:$0xff]
        %v394 = vld [vmem:[%s381 + $0x20] sm:$0xff]
        %v395 = vld [vmem:[%s381 + $0x28] sm:$0xff]
        %v396 = vld [vmem:[%s381 + $0x30] sm:$0xff]
        %v397 = vld [vmem:[%s381 + $0x38] sm:$0xff]
        %406 = vrot.lane.b32.xlu0 %v382, 2
        %v407 = vpop.permute.xlu0 %406
        %408 = vrot.lane.b32.xlu0 %v383, 2
        %v409 = vpop.permute.xlu0 %408
        %410 = vrot.lane.b32.xlu0 %v384, 2
        %v411 = vpop.permute.xlu0 %410
        %412 = vrot.lane.b32.xlu0 %v385, 2
        %v413 = vpop.permute.xlu0 %412
        %414 = vrot.lane.b32.xlu0 %v386, 2
        %v415 = vpop.permute.xlu0 %414
        %416 = vrot.lane.b32.xlu0 %v387, 2
        %v417 = vpop.permute.xlu0 %416
        %418 = vrot.lane.b32.xlu0 %v388, 2
        %v419 = vpop.permute.xlu0 %418
        %420 = vrot.lane.b32.xlu0 %v389, 2
        %v421 = vpop.permute.xlu0 %420
        %vm430 = vcmask 15360
        %v431 = vsel %vm430, %v390, %v407
        %v432 = vsel %vm430, %v391, %v409
        %v433 = vsel %vm430, %v392, %v411
        %v434 = vsel %vm430, %v393, %v413
        %v435 = vsel %vm430, %v394, %v415
        %v436 = vsel %vm430, %v395, %v417
        %v437 = vsel %vm430, %v396, %v419
        %v438 = vsel %vm430, %v397, %v421
        %v439 = vsel %vm430, %v407, %v390
        %v440 = vsel %vm430, %v409, %v391
        %v441 = vsel %vm430, %v411, %v392
        %v442 = vsel %vm430, %v413, %v393
        %v443 = vsel %vm430, %v415, %v394
        %v444 = vsel %vm430, %v417, %v395
        %v445 = vsel %vm430, %v419, %v396
        %v446 = vsel %vm430, %v421, %v397
        %463 = vrot.lane.b32.xlu0 %v431, 126
        %v464 = vpop.permute.xlu0 %463
        %465 = vrot.lane.b32.xlu0 %v439, 126
        %v466 = vpop.permute.xlu0 %465
        %467 = vrot.lane.b32.xlu0 %v432, 126
        %v468 = vpop.permute.xlu0 %467
        %469 = vrot.lane.b32.xlu0 %v440, 126
        %v470 = vpop.permute.xlu0 %469
        %471 = vrot.lane.b32.xlu0 %v433, 126
        %v472 = vpop.permute.xlu0 %471
        %473 = vrot.lane.b32.xlu0 %v441, 126
        %v474 = vpop.permute.xlu0 %473
        %475 = vrot.lane.b32.xlu0 %v434, 126
        %v476 = vpop.permute.xlu0 %475
        %477 = vrot.lane.b32.xlu0 %v442, 126
        %v478 = vpop.permute.xlu0 %477
        %479 = vrot.lane.b32.xlu0 %v435, 126
        %v480 = vpop.permute.xlu0 %479
        %481 = vrot.lane.b32.xlu0 %v443, 126
        %v482 = vpop.permute.xlu0 %481
        %483 = vrot.lane.b32.xlu0 %v436, 126
        %v484 = vpop.permute.xlu0 %483
        %485 = vrot.lane.b32.xlu0 %v444, 126
        %v486 = vpop.permute.xlu0 %485
        %487 = vrot.lane.b32.xlu0 %v437, 126
        %v488 = vpop.permute.xlu0 %487
        %489 = vrot.lane.b32.xlu0 %v445, 126
        %v490 = vpop.permute.xlu0 %489
        %491 = vrot.lane.b32.xlu0 %v438, 126
        %v492 = vpop.permute.xlu0 %491
        %493 = vrot.lane.b32.xlu0 %v446, 126
        %v494 = vpop.permute.xlu0 %493
        %vm495 = vcmask 1031168
        %v496 = vsel %vm495, %v464, %v466
        %v497 = vsel %vm495, %v468, %v470
        %v498 = vsel %vm495, %v472, %v474
        %v499 = vsel %vm495, %v476, %v478
        %v500 = vsel %vm495, %v480, %v482
        %v501 = vsel %vm495, %v484, %v486
        %v502 = vsel %vm495, %v488, %v490
        %v503 = vsel %vm495, %v492, %v494
        %512 = vrot.lane.b32.xlu0 %v431, 124
        %v513 = vpop.permute.xlu0 %512
        %514 = vrot.lane.b32.xlu0 %v439, 124
        %v515 = vpop.permute.xlu0 %514
        %516 = vrot.lane.b32.xlu0 %v432, 124
        %v517 = vpop.permute.xlu0 %516
        %518 = vrot.lane.b32.xlu0 %v440, 124
        %v519 = vpop.permute.xlu0 %518
        %520 = vrot.lane.b32.xlu0 %v433, 124
        %v521 = vpop.permute.xlu0 %520
        %522 = vrot.lane.b32.xlu0 %v441, 124
        %v523 = vpop.permute.xlu0 %522
        %524 = vrot.lane.b32.xlu0 %v434, 124
        %v525 = vpop.permute.xlu0 %524
        %526 = vrot.lane.b32.xlu0 %v442, 124
        %v527 = vpop.permute.xlu0 %526
        %528 = vrot.lane.b32.xlu0 %v435, 124
        %v529 = vpop.permute.xlu0 %528
        %530 = vrot.lane.b32.xlu0 %v443, 124
        %v531 = vpop.permute.xlu0 %530
        %532 = vrot.lane.b32.xlu0 %v436, 124
        %v533 = vpop.permute.xlu0 %532
        %534 = vrot.lane.b32.xlu0 %v444, 124
        %v535 = vpop.permute.xlu0 %534
        %536 = vrot.lane.b32.xlu0 %v437, 124
        %v537 = vpop.permute.xlu0 %536
        %538 = vrot.lane.b32.xlu0 %v445, 124
        %v539 = vpop.permute.xlu0 %538
        %540 = vrot.lane.b32.xlu0 %v438, 124
        %v541 = vpop.permute.xlu0 %540
        %542 = vrot.lane.b32.xlu0 %v446, 124
        %v543 = vpop.permute.xlu0 %542
        %vm544 = vcmask 1014784
        %v545 = vsel %vm544, %v513, %v515
        %v546 = vsel %vm544, %v517, %v519
        %v547 = vsel %vm544, %v521, %v523
        %v548 = vsel %vm544, %v525, %v527
        %v549 = vsel %vm544, %v529, %v531
        %v550 = vsel %vm544, %v533, %v535
        %v551 = vsel %vm544, %v537, %v539
        %v552 = vsel %vm544, %v541, %v543
        %v561 = vld [vmem:[#allocation3] sm:$0xff]
        %v562 = vld [vmem:[#allocation3 + $0x8] sm:$0xff]
        %v563 = vld [vmem:[#allocation3 + $0x10] sm:$0xff]
        %v564 = vld [vmem:[#allocation3 + $0x18] sm:$0xff]
        %v565 = vld [vmem:[#allocation3 + $0x20] sm:$0xff]
        %v566 = vld [vmem:[#allocation3 + $0x28] sm:$0xff]
        %v567 = vld [vmem:[#allocation3 + $0x30] sm:$0xff]
        %v568 = vld [vmem:[#allocation3 + $0x38] sm:$0xff]
        %v569 = vld [vmem:[#allocation3 + $0x40] sm:$0xff]
        %v570 = vld [vmem:[#allocation3 + $0x48] sm:$0xff]
        %v571 = vld [vmem:[#allocation3 + $0x50] sm:$0xff]
        %v572 = vld [vmem:[#allocation3 + $0x58] sm:$0xff]
        %v573 = vld [vmem:[#allocation3 + $0x60] sm:$0xff]
        %v574 = vld [vmem:[#allocation3 + $0x68] sm:$0xff]
        %v575 = vld [vmem:[#allocation3 + $0x70] sm:$0xff]
        %v576 = vld [vmem:[#allocation3 + $0x78] sm:$0xff]
        %v577 = vld [vmem:[%s3] sm:$0xff]
        %v578 = vld [vmem:[%s3 + $0x8] sm:$0xff]
        %v579 = vld [vmem:[%s3 + $0x10] sm:$0xff]
        %v580 = vld [vmem:[%s3 + $0x18] sm:$0xff]
        %v581 = vld [vmem:[%s3 + $0x20] sm:$0xff]
        %v582 = vld [vmem:[%s3 + $0x28] sm:$0xff]
        %v583 = vld [vmem:[%s3 + $0x30] sm:$0xff]
        %v584 = vld [vmem:[%s3 + $0x38] sm:$0xff]
        %586 = vset.pattern.permute.xlu0 0
        %587 = vperm.xlu0 %586, %v577
        %v588 = vpop.permute.xlu0 %587
        %591 = vset.pattern.permute.xlu0 0
        %592 = vperm.xlu0 %591, %v578
        %v593 = vpop.permute.xlu0 %592
        %596 = vset.pattern.permute.xlu0 0
        %597 = vperm.xlu0 %596, %v579
        %v598 = vpop.permute.xlu0 %597
        %601 = vset.pattern.permute.xlu0 0
        %602 = vperm.xlu0 %601, %v580
        %v603 = vpop.permute.xlu0 %602
        %606 = vset.pattern.permute.xlu0 0
        %607 = vperm.xlu0 %606, %v581
        %v608 = vpop.permute.xlu0 %607
        %611 = vset.pattern.permute.xlu0 0
        %612 = vperm.xlu0 %611, %v582
        %v613 = vpop.permute.xlu0 %612
        %616 = vset.pattern.permute.xlu0 0
        %617 = vperm.xlu0 %616, %v583
        %v618 = vpop.permute.xlu0 %617
        %621 = vset.pattern.permute.xlu0 0
        %622 = vperm.xlu0 %621, %v584
        %v623 = vpop.permute.xlu0 %622
        %vm625 = vcmask 523264
        %v627 = vsel %vm625, %v562, 0
        %v630 = vsel %vm625, %v564, 0
        %v633 = vsel %vm625, %v566, 0
        %v636 = vsel %vm625, %v568, 0
        %v639 = vsel %vm625, %v570, 0
        %v642 = vsel %vm625, %v572, 0
        %v645 = vsel %vm625, %v574, 0
        %v648 = vsel %vm625, %v576, 0
        %650 = vmatpush.msra.mxu0 %v503
        %651 = vmatpush.msra.mxu0 %v502
        %652 = vmatpush.msra.mxu0 %v501
        %653 = vmatpush.msra.mxu0 %v500
        %654 = vmatpush.msra.mxu0 %v499
        %655 = vmatpush.msra.mxu0 %v498
        %656 = vmatpush.msra.mxu0 %v497
        %657 = vmatpush.msra.mxu0 %v496
        %658 = vmatpush.msra.mxu0 %v438
        %659 = vmatpush.msra.mxu0 %v437
        %660 = vmatpush.msra.mxu0 %v436
        %661 = vmatpush.msra.mxu0 %v435
        %662 = vmatpush.msra.mxu0 %v434
        %663 = vmatpush.msra.mxu0 %v433
        %664 = vmatpush.msra.mxu0 %v432
        %665 = vmatpush.msra.mxu0 %v431
        %666 = vmatmul.f32.gmra.mxu0 %v561
        %v667 = vpop.f32.mrf.mxu0
        %v668 = vadd.f32 %v588, %v667
        %669 = vmatmul.f32.gmra.mxu0 %v563
        %v670 = vpop.f32.mrf.mxu0
        %v671 = vadd.f32 %v593, %v670
        %672 = vmatmul.f32.gmra.mxu0 %v565
        %v673 = vpop.f32.mrf.mxu0
        %v674 = vadd.f32 %v598, %v673
        %675 = vmatmul.f32.gmra.mxu0 %v567
        %v676 = vpop.f32.mrf.mxu0
        %v677 = vadd.f32 %v603, %v676
        %678 = vmatmul.f32.gmra.mxu0 %v569
        %v679 = vpop.f32.mrf.mxu0
        %v680 = vadd.f32 %v608, %v679
        %681 = vmatmul.f32.gmra.mxu0 %v571
        %v682 = vpop.f32.mrf.mxu0
        %v683 = vadd.f32 %v613, %v682
        %684 = vmatmul.f32.gmra.mxu0 %v573
        %v685 = vpop.f32.mrf.mxu0
        %v686 = vadd.f32 %v618, %v685
        %687 = vmatmul.f32.gmra.mxu0 %v575
        %v688 = vpop.f32.mrf.mxu0
        %v689 = vadd.f32 %v623, %v688
        %690 = vdwg.mxu0
        %691 = vmatpush.msra.mxu0 0.0
        %692 = vmatpush.msra.mxu0 0.0
        %693 = vmatpush.msra.mxu0 0.0
        %694 = vmatpush.msra.mxu0 0.0
        %695 = vmatpush.msra.mxu0 0.0
        %696 = vmatpush.msra.mxu0 0.0
        %697 = vmatpush.msra.mxu0 0.0
        %698 = vmatpush.msra.mxu0 0.0
        %699 = vmatpush.msra.mxu0 %v552
        %700 = vmatpush.msra.mxu0 %v551
        %701 = vmatpush.msra.mxu0 %v550
        %702 = vmatpush.msra.mxu0 %v549
        %703 = vmatpush.msra.mxu0 %v548
        %704 = vmatpush.msra.mxu0 %v547
        %705 = vmatpush.msra.mxu0 %v546
        %706 = vmatpush.msra.mxu0 %v545
        %707 = vmatmul.f32.gmra.mxu0 %v627
        %v708 = vpop.f32.mrf.mxu0
        %v709 = vadd.f32 %v668, %v708
        %710 = vmatmul.f32.gmra.mxu0 %v630
        %v711 = vpop.f32.mrf.mxu0
        %v712 = vadd.f32 %v671, %v711
        %713 = vmatmul.f32.gmra.mxu0 %v633
        %v714 = vpop.f32.mrf.mxu0
        %v715 = vadd.f32 %v674, %v714
        %716 = vmatmul.f32.gmra.mxu0 %v636
        %v717 = vpop.f32.mrf.mxu0
        %v718 = vadd.f32 %v677, %v717
        %719 = vmatmul.f32.gmra.mxu0 %v639
        %v720 = vpop.f32.mrf.mxu0
        %v721 = vadd.f32 %v680, %v720
        %722 = vmatmul.f32.gmra.mxu0 %v642
        %v723 = vpop.f32.mrf.mxu0
        %v724 = vadd.f32 %v683, %v723
        %725 = vmatmul.f32.gmra.mxu0 %v645
        %v726 = vpop.f32.mrf.mxu0
        %v727 = vadd.f32 %v686, %v726
        %728 = vmatmul.f32.gmra.mxu0 %v648
        %v729 = vpop.f32.mrf.mxu0
        %v730 = vadd.f32 %v689, %v729
        %731 = vdwg.mxu0
        %v732 = vmax.f32 %v709, 0.0
        %v733 = vmax.f32 %v712, 0.0
        %v734 = vmax.f32 %v715, 0.0
        %v735 = vmax.f32 %v718, 0.0
        %v736 = vmax.f32 %v721, 0.0
        %v737 = vmax.f32 %v724, 0.0
        %v738 = vmax.f32 %v727, 0.0
        %v739 = vmax.f32 %v730, 0.0
        %v740 = vld [vmem:[%s4] sm:$0xff]
        %v741 = vld [vmem:[%s4 + $0x8] sm:$0xff]
        %v742 = vld [vmem:[%s4 + $0x10] sm:$0xff]
        %v743 = vld [vmem:[%s4 + $0x18] sm:$0xff]
        %v744 = vld [vmem:[%s4 + $0x20] sm:$0xff]
        %v745 = vld [vmem:[%s4 + $0x28] sm:$0xff]
        %v746 = vld [vmem:[%s4 + $0x30] sm:$0xff]
        %v747 = vld [vmem:[%s4 + $0x38] sm:$0xff]
        %v748 = vld [vmem:[%s5] sm:$0xff]
        %v749 = vld [vmem:[%s5 + $0x8] sm:$0xff]
        %v750 = vld [vmem:[%s5 + $0x10] sm:$0xff]
        %v751 = vld [vmem:[%s5 + $0x18] sm:$0xff]
        %v752 = vld [vmem:[%s5 + $0x20] sm:$0xff]
        %v753 = vld [vmem:[%s5 + $0x28] sm:$0xff]
        %v754 = vld [vmem:[%s5 + $0x30] sm:$0xff]
        %v755 = vld [vmem:[%s5 + $0x38] sm:$0xff]
        %757 = vset.pattern.permute.xlu0 0
        %758 = vperm.xlu0 %757, %v748
        %v759 = vpop.permute.xlu0 %758
        %762 = vset.pattern.permute.xlu0 0
        %763 = vperm.xlu0 %762, %v749
        %v764 = vpop.permute.xlu0 %763
        %767 = vset.pattern.permute.xlu0 0
        %768 = vperm.xlu0 %767, %v750
        %v769 = vpop.permute.xlu0 %768
        %772 = vset.pattern.permute.xlu0 0
        %773 = vperm.xlu0 %772, %v751
        %v774 = vpop.permute.xlu0 %773
        %777 = vset.pattern.permute.xlu0 0
        %778 = vperm.xlu0 %777, %v752
        %v779 = vpop.permute.xlu0 %778
        %782 = vset.pattern.permute.xlu0 0
        %783 = vperm.xlu0 %782, %v753
        %v784 = vpop.permute.xlu0 %783
        %787 = vset.pattern.permute.xlu0 0
        %788 = vperm.xlu0 %787, %v754
        %v789 = vpop.permute.xlu0 %788
        %792 = vset.pattern.permute.xlu0 0
        %793 = vperm.xlu0 %792, %v755
        %v794 = vpop.permute.xlu0 %793
        %v797 = vsel %vm625, %v740, 0
        %v800 = vsel %vm625, %v741, 0
        %v803 = vsel %vm625, %v742, 0
        %v806 = vsel %vm625, %v743, 0
        %v809 = vsel %vm625, %v744, 0
        %v812 = vsel %vm625, %v745, 0
        %v815 = vsel %vm625, %v746, 0
        %v818 = vsel %vm625, %v747, 0
        %820 = vmatpush.msra.mxu0 0.0
        %821 = vmatpush.msra.mxu0 0.0
        %822 = vmatpush.msra.mxu0 0.0
        %823 = vmatpush.msra.mxu0 0.0
        %824 = vmatpush.msra.mxu0 0.0
        %825 = vmatpush.msra.mxu0 0.0
        %826 = vmatpush.msra.mxu0 0.0
        %827 = vmatpush.msra.mxu0 0.0
        %828 = vmatpush.msra.mxu0 %v739
        %829 = vmatpush.msra.mxu0 %v738
        %830 = vmatpush.msra.mxu0 %v737
        %831 = vmatpush.msra.mxu0 %v736
        %832 = vmatpush.msra.mxu0 %v735
        %833 = vmatpush.msra.mxu0 %v734
        %834 = vmatpush.msra.mxu0 %v733
        %835 = vmatpush.msra.mxu0 %v732
        %836 = vmatmul.f32.gmra.mxu0 %v797
        %v837 = vpop.f32.mrf.mxu0
        %v838 = vadd.f32 %v759, %v837
        %839 = vmatmul.f32.gmra.mxu0 %v800
        %v840 = vpop.f32.mrf.mxu0
        %v841 = vadd.f32 %v764, %v840
        %842 = vmatmul.f32.gmra.mxu0 %v803
        %v843 = vpop.f32.mrf.mxu0
        %v844 = vadd.f32 %v769, %v843
        %845 = vmatmul.f32.gmra.mxu0 %v806
        %v846 = vpop.f32.mrf.mxu0
        %v847 = vadd.f32 %v774, %v846
        %848 = vmatmul.f32.gmra.mxu0 %v809
        %v849 = vpop.f32.mrf.mxu0
        %v850 = vadd.f32 %v779, %v849
        %851 = vmatmul.f32.gmra.mxu0 %v812
        %v852 = vpop.f32.mrf.mxu0
        %v853 = vadd.f32 %v784, %v852
        %854 = vmatmul.f32.gmra.mxu0 %v815
        %v855 = vpop.f32.mrf.mxu0
        %v856 = vadd.f32 %v789, %v855
        %857 = vmatmul.f32.gmra.mxu0 %v818
        %v858 = vpop.f32.mrf.mxu0
        %v859 = vadd.f32 %v794, %v858
        %860 = vdwg.mxu0
        %v861 = vadd.f32 %v382, %v838
        %v862 = vadd.f32 %v383, %v841
        %v863 = vadd.f32 %v384, %v844
        %v864 = vadd.f32 %v385, %v847
        %v865 = vadd.f32 %v386, %v850
        %v866 = vadd.f32 %v387, %v853
        %v867 = vadd.f32 %v388, %v856
        %v868 = vadd.f32 %v389, %v859
        %869 = vst [vmem:[%s372] sm:$0xff] %v861
        %870 = vst [vmem:[%s372 + $0x8] sm:$0xff] %v862
        %871 = vst [vmem:[%s372 + $0x10] sm:$0xff] %v863
        %872 = vst [vmem:[%s372 + $0x18] sm:$0xff] %v864
        %873 = vst [vmem:[%s372 + $0x20] sm:$0xff] %v865
        %874 = vst [vmem:[%s372 + $0x28] sm:$0xff] %v866
        %875 = vst [vmem:[%s372 + $0x30] sm:$0xff] %v867
        %876 = vst [vmem:[%s372 + $0x38] sm:$0xff] %v868
        %s877 = sand.u32 %s183, 1
        %s878 = scalar_lea.sflag [#allocation5], %s877
        %s879 = sand.u32 %s183, 1
        %s880 = smul.addr %s879, 64
        %s881 = scalar_lea.vmem [#allocation6], %s880
        // Predicated region
        $region87: #{tpu_custom_call.1} parent=77 // pred_check
          %p882 = pneg %p193
        $region88: #{tpu_custom_call.1} parent=77 // pred_check_branch
          %884 = sbr.rel (%p882) target = $region90
        $region89: #{tpu_custom_call.1} parent=77 // pred_region
          %886 = vsyncadd %s878, 0
          %s887 = smul.addr %s25, 32
          %s888 = sadd.s32 %s26, %s887
          %s889 = smul.addr %s888, 8
          %s890 = scalar_lea.hbm %s6, %s889
          %s891 = sshll.u32 %s881, 4
          %s892 = int_to_ptr.vmem [resolvable:$true] %s891
          %s893 = sshll.u32 %s890, 4
          %s894 = int_to_ptr.hbm [resolvable:$true] %s893
          %899 = dma.vmem_to_hbm [thread:$0]  %s892, 1024, %s894, %s878, 128, 512, 8
        $region90: #{tpu_custom_call.1} parent=77 // pred_fallthru
          _
      $region78: #{tpu_custom_call.1} parent=5 // pred_fallthru
        _
      %p900 = scmp.le.s32.totalorder 2, %s16
      // Predicated region
      $region91: #{tpu_custom_call.1} parent=5 // pred_check
        %p901 = pneg %p900
      $region92: #{tpu_custom_call.1} parent=5 // pred_check_branch
        %903 = sbr.rel (%p901) target = $region94
      $region93: #{tpu_custom_call.1} parent=5 // pred_region
        %s904 = ssub.s32 %s16, 2
        // Predicated region
        $region95: #{tpu_custom_call.1} parent=93 // pred_check
          %p905 = pneg %p199
        $region96: #{tpu_custom_call.1} parent=93 // pred_check_branch
          %907 = sbr.rel (%p905) target = $region98
        $region97: #{tpu_custom_call.1} parent=93 // pred_region
          %s908 = sand.u32 %s184, 1
          %s909 = scalar_lea.sflag [#allocation5], %s908
          %s910 = sand.u32 %s184, 1
          %s911 = smul.addr %s910, 64
          %s912 = scalar_lea.vmem [#allocation6], %s911
          %914 = dma.done %s909, 1024
        $region98: #{tpu_custom_call.1} parent=93 // pred_fallthru
          _
      $region94: #{tpu_custom_call.1} parent=5 // pred_fallthru
        _
    $region6: #{tpu_custom_call.1} parent=1 // loop_footer
      %s20 = sadd.s32 1, %s16
    $region7: #{tpu_custom_call.1} parent=1 // loop_footer_branch
      %15 = sbr.rel target = $region3
    $region8: #{tpu_custom_call.1} parent=1 // loop_exit
      _
    %915 = vsyncpa [#allocation4], 1
    %s916 = scalar_lea.sflag [#allocation4], 1
    %917 = vsyncpa %s916, 1
    %918 = vsyncpa [#allocation5], 1
    %s919 = scalar_lea.sflag [#allocation5], 1
    %920 = vsyncpa %s919, 1

</llo_original>
